<compile_context>
chip_gen: v7x
topology: tpu7x:2x2x1
jax: 0.10.0
libtpu: 0.0.40
codegen_flags: <defaults>
</compile_context>

<pallas_src>
import jax
import jax.numpy as jnp
from jax.experimental import pallas as pl
from jax.experimental.pallas import tpu as pltpu

VIEW_TAIL = (1, 16, 25)          # target view: (-1, 1, 16, 25)
INNER = 1 * 16 * 25              # 400 elements per output "row"


def _copy_kernel(x_ref, o_ref):
    o_ref[...] = x_ref[...]


def view2(x):
    """Pallas equivalent of torch `x.view(-1, 1, 16, 25)` (contiguous input)."""
    total = x.size
    assert total % INNER == 0, "input element count must be divisible by 400"
    n = total // INNER

    # Row-major flatten: same element order torch .view() assumes; metadata only.
    x2 = jnp.reshape(x, (n, INNER))

    max_rows = 4096              # 4096 * 400 * 4 B ≈ 6.25 MiB per VMEM buffer
    if n <= max_rows:
        # Whole array as one block: single launch, single DMA in/out.
        out2 = pl.pallas_call(
            _copy_kernel,
            out_shape=jax.ShapeDtypeStruct((n, INNER), x.dtype),
        )(x2)
    else:
        tr = max_rows            # multiple of 8 -> valid sublane tiling
        out2 = pl.pallas_call(
            _copy_kernel,
            out_shape=jax.ShapeDtypeStruct((n, INNER), x.dtype),
            grid_spec=pltpu.PrefetchScalarGridSpec(
                num_scalar_prefetch=0,
                grid=(pl.cdiv(n, tr),),
                in_specs=[pl.BlockSpec((tr, INNER), lambda i: (i, 0))],
                out_specs=pl.BlockSpec((tr, INNER), lambda i: (i, 0)),
            ),
            compiler_params=pltpu.CompilerParams(
                # independent rows -> shard across TensorCores on v7x
                dimension_semantics=("parallel",),
            ),
        )(x2)

    # Final reshape to the torch view target is metadata-only.
    return jnp.reshape(out2, (n,) + VIEW_TAIL)


if __name__ == "__main__":
    key = jax.random.PRNGKey(0)

    # Small input consistent with the module: (B, 16, 25) views to (B, 1, 16, 25).
    B = 2
    x = jax.random.normal(key, (B, 16, 25), dtype=jnp.float32)

    view2_jit = jax.jit(view2)
    y = view2_jit(x)
    y = jax.block_until_ready(y)

    assert y.shape == (B, 1, 16, 25)
    # A view must preserve values in row-major order.
    assert bool(jnp.array_equal(jnp.reshape(y, x.shape), x))
    assert bool(jnp.all(jnp.isfinite(y)))

    print("KERNEL_OK")
</pallas_src>

<mosaic_0001>
module attributes {stable_mosaic.version = 11 : i64} {
  func.func @_copy_kernel(%arg0: memref<2x400xf32, #tpu.memory_space<vmem>>, %arg1: memref<2x400xf32, #tpu.memory_space<vmem>>) attributes {dimension_semantics = [], scalar_prefetch = 0 : i64, scratch_operands = 0 : i64, tpu.core_type = #tpu.core_type<tc>} {
    %c0 = arith.constant 0 : index
    %c0_0 = arith.constant 0 : index
    %0 = vector.load %arg0[%c0, %c0_0] : memref<2x400xf32, #tpu.memory_space<vmem>>, vector<2x400xf32>
    %c0_1 = arith.constant 0 : index
    %c0_2 = arith.constant 0 : index
    %1 = vector.load %arg1[%c0_1, %c0_2] : memref<2x400xf32, #tpu.memory_space<vmem>>, vector<2x400xf32>
    tpu.vector_store %arg1[%c0_1, %c0_2], %0 {strides = array<i32>} : memref<2x400xf32, #tpu.memory_space<vmem>>, vector<2x400xf32>,
    return
  }
}

</mosaic_0001>

<llo_original>
// kernel: view2.1
$region0: #{view2.1}
  #allocation0 [shape = 'u32[]', space=smem, size = 0x4, offset = 0x4, fixed_abs, tag = 'smem constant byte address 0x4 - core index']
  #allocation1 [shape = 'u32[144,128]{1,0:T(1,128)}', space=vmem, size = 0x12000, scoped, tag = 'internal scratch']
  %s0 = inlined_call_operand.vmem [shape: f32[2,400], index: 0, kind: input, shape index: {}]
  %s1 = inlined_call_operand.vmem [shape: f32[2,400], index: 1, kind: output, shape index: {}]
  %s2 = sld [smem:[#allocation0]]
  $region14: #{view2.1} parent=0
    _
  %s4 = ssub.s32 1, %s2
  %s5 = scalar_select 0, %s4, %s2
  // Predicated region
  $region2: #{view2.1} parent=0 // pred_check
    _
  $region3: #{view2.1} parent=0 // pred_check_branch
    %7 = sbr.rel (0) target = $region5
  $region4: #{view2.1} parent=0 // pred_region
    _
  $region5: #{view2.1} parent=0 // pred_fallthru
    _
  %v8 = vld [vmem:[%s0] sm:$0xff]
  %vm9 = vcmask 1041408
  %vm10 = vcmask 1043458
  %vm11 = vmor %vm10, %vm9
  %vm12 = vcmask 1045508
  %vm13 = vmor %vm12, %vm11
  %vm14 = vcmask 130054
  %vm15 = vmor %vm14, %vm13
  %16 = vst.msk [vmem:[%s1] sm:$0xff] %vm15, %v8
  // Predicated region
  $region6: #{view2.1} parent=0 // pred_check
    _
  $region7: #{view2.1} parent=0 // pred_check_branch
    %18 = sbr.rel (0) target = $region9
  $region8: #{view2.1} parent=0 // pred_region
    _
  $region9: #{view2.1} parent=0 // pred_fallthru
    _
  // Predicated region
  $region10: #{view2.1} parent=0 // pred_check
    _
  $region11: #{view2.1} parent=0 // pred_check_branch
    %20 = sbr.rel (0) target = $region13
  $region12: #{view2.1} parent=0 // pred_region
    _
  $region13: #{view2.1} parent=0 // pred_fallthru
    _

</llo_original>
